<compile_context>
chip_gen: v6e
topology: v6e:2x2x1
jax: 0.10.0
libtpu: 0.0.40
codegen_flags: <defaults>
</compile_context>

<pallas_src>
import functools
import warnings

import jax
import jax.numpy as jnp
from jax.experimental import pallas as pl
from jax.experimental.pallas import tpu as pltpu


def _round_up(x, m):
    return ((x + m - 1) // m) * m


def _vmem_capacity_bytes():
    """Physical VMEM of the current TPU generation (fallback: v7x's 64 MiB per core)."""
    try:
        return int(pltpu.get_tpu_info().vmem_capacity_bytes)
    except Exception as e:  # noqa: BLE001
        warnings.warn(f"pltpu.get_tpu_info() failed ({e!r}); assuming 64 MiB VMEM (v7x).")
        return 64 * 1024 * 1024


# ---------------------------------------------------------------------------
# Fused single-pass kernel: one batch element (full S) per grid step.
# ---------------------------------------------------------------------------
def _fused_kernel(x_ref, w_ref, b_ref, o_ref, *, inv_s):
    x = x_ref[0]                                                     # (C, S), native dtype
    # f32-accumulated global average pool over the full (exact) S extent.
    pooled = jnp.sum(x, axis=-1, keepdims=True, dtype=jnp.float32) * inv_s   # (C, 1)
    # Tiny channel mix + bias + sigmoid: O(C^2), once per batch element.
    z = jnp.dot(w_ref[...].astype(jnp.float32), pooled,
                preferred_element_type=jnp.float32)                  # (C, 1)
    gate = jax.nn.sigmoid(z + b_ref[...].astype(jnp.float32))        # (C, 1) f32
    # Gate multiply in the input's native dtype (matches PyTorch bf16 behavior;
    # avoids a full-tile f32 copy of x).
    o_ref[0] = (x * gate.astype(x.dtype)).astype(o_ref.dtype)


# ---------------------------------------------------------------------------
# Two-pass kernels (S tiled, no external padding).
# ---------------------------------------------------------------------------
def _pool_sum_kernel(x_ref, sum_ref, *, s_total, s_tile):
    # Grid (N, cdiv(S, s_tile)); S is the last ("arbitrary") reduction axis.
    # Output block index is constant along S -> resident f32 accumulator.
    @pl.when(pl.program_id(1) == 0)
    def _():
        sum_ref[...] = jnp.zeros_like(sum_ref)

    x = x_ref[0]                                                     # (C, s_tile)
    if s_total % s_tile != 0:
        # Last S block extends past the array edge: OOB lanes are unspecified -> mask.
        lane = jax.lax.broadcasted_iota(jnp.int32, x.shape, 1)
        valid = (pl.program_id(1) * s_tile + lane) < s_total
        x = jnp.where(valid, x, jnp.zeros_like(x))
    sum_ref[0] += jnp.sum(x, axis=-1, keepdims=True, dtype=jnp.float32)   # (C, 1)


def _gate_mul_kernel(g_ref, x_ref, o_ref):
    x = x_ref[0]                                                     # (C, s_tile), native dtype
    # OOB lanes of the last block may hold garbage, but Pallas clips the OOB part
    # of the output write, so no masking is needed here.
    o_ref[0] = (x * g_ref[0].astype(x.dtype)).astype(o_ref.dtype)


# ---------------------------------------------------------------------------
# Wrapper.
# ---------------------------------------------------------------------------
def se_gating(x, weight, bias, *, fused=None, s_tile=None):
    """SEGating forward.

    x:      (N, C, T, H, W)
    weight: (C, C)  -- Conv3d(C, C, k=1) kernel squeezed from (C, C, 1, 1, 1)
    bias:   (C,)
    fused / s_tile: optional overrides for the dispatch / tile-size heuristics.
    """
    N, C, T, H, W = x.shape
    S = T * H * W
    itemsize = jnp.dtype(x.dtype).itemsize
    c_pad = _round_up(C, 8)                  # sublane-padded channel extent
    s_full = _round_up(S, 128)               # lane-padded S extent (VMEM layout)

    # Per-generation VMEM budget: ~75% of physical (96 MiB v5e/v6e, 48 MiB v7x),
    # and ~75% of that for x double buffers (headroom for compiler scratch / temps).
    vmem_cap = _vmem_capacity_bytes()
    vmem_limit = int((vmem_cap * 3) // 4)
    x_budget = (vmem_limit * 3) // 4

    # Fused footprint: 2 input + 2 output native double buffers of the (C, S) block,
    # plus one conservative f32 temp for the f32-accumulated reduction of sub-f32 inputs.
    fused_block_bytes = c_pad * s_full * itemsize
    fused_footprint = 4 * fused_block_bytes + c_pad * s_full * 4
    if fused is None:
        # N < 4 gives too few grid steps for DMA/compute overlap in the fused path.
        fused = (fused_footprint <= x_budget) and (N >= 4)

    compiler = functools.partial(pltpu.CompilerParams, vmem_limit_bytes=vmem_limit)

    x_flat = x.reshape(N, C, S)
    b_col = bias.reshape(C, 1)

    if fused:
        cost = pl.CostEstimate(
            flops=2 * N * C * S + 2 * N * C * C,
            transcendentals=N * C,
            bytes_accessed=2 * N * C * S * itemsize + C * C * 4 + C * 4)
        out_flat = pl.pallas_call(
            functools.partial(_fused_kernel, inv_s=1.0 / S),
            out_shape=jax.ShapeDtypeStruct((N, C, S), x.dtype),
            grid_spec=pltpu.PrefetchScalarGridSpec(
                num_scalar_prefetch=0,
                grid=(N,),
                in_specs=[
                    pl.BlockSpec((1, C, S), lambda n: (n, 0, 0)),       # x (full-extent block)
                    pl.BlockSpec((C, C), lambda n: (0, 0)),             # conv weight
                    pl.BlockSpec((C, 1), lambda n: (0, 0)),             # conv bias
                ],
                out_specs=pl.BlockSpec((1, C, S), lambda n: (n, 0, 0)),
            ),
            compiler_params=compiler(dimension_semantics=("parallel",)),
            cost_estimate=cost,
        )(x_flat, weight, b_col)
    else:
        # --- choose a lane-dense S tile, purely VMEM-budget driven -----------------
        bytes_per_lane = 4 * c_pad * itemsize        # 2 in + 2 out double buffers (pass 2)
        if s_tile is None:
            s_tile = max(128, (x_budget // bytes_per_lane) // 128 * 128)
        s_tile = max(128, min((int(s_tile) // 128) * 128, s_full))
        num_s = pl.cdiv(S, s_tile)

        # --- pass 1: per-channel f32 sums, S tiled + accumulated -------------------
        cost1 = pl.CostEstimate(
            flops=N * C * S, transcendentals=0,
            bytes_accessed=N * C * S * itemsize + N * C * 4)
        sums = pl.pallas_call(
            functools.partial(_pool_sum_kernel, s_total=S, s_tile=s_tile),
            out_shape=jax.ShapeDtypeStruct((N, C, 1), jnp.float32),
            grid_spec=pltpu.PrefetchScalarGridSpec(
                num_scalar_prefetch=0,
                grid=(N, num_s),
                in_specs=[pl.BlockSpec((1, C, s_tile), lambda n, s: (n, 0, s))],
                out_specs=pl.BlockSpec((1, C, 1), lambda n, s: (n, 0, 0)),
            ),
            compiler_params=compiler(dimension_semantics=("parallel", "arbitrary")),
            cost_estimate=cost1,
        )(x_flat)

        # --- tiny channel mix + bias + sigmoid hoisted off the hot path (XLA) ------
        pooled = sums[:, :, 0] * (1.0 / S)                                   # (N, C) f32
        gate = jax.nn.sigmoid(
            pooled @ weight.astype(jnp.float32).T + bias.astype(jnp.float32))
        gate = gate.reshape(N, C, 1)                                         # (N, C, 1) f32

        # --- pass 2: broadcast gate multiply; both grid axes independent -----------
        cost2 = pl.CostEstimate(
            flops=N * C * S, transcendentals=0,
            bytes_accessed=2 * N * C * S * itemsize + N * C * 4)
        out_flat = pl.pallas_call(
            _gate_mul_kernel,
            out_shape=jax.ShapeDtypeStruct((N, C, S), x.dtype),
            grid_spec=pltpu.PrefetchScalarGridSpec(
                num_scalar_prefetch=0,
                grid=(N, num_s),
                in_specs=[
                    pl.BlockSpec((1, C, 1), lambda n, s: (n, 0, 0)),         # gate
                    pl.BlockSpec((1, C, s_tile), lambda n, s: (n, 0, s)),    # x
                ],
                out_specs=pl.BlockSpec((1, C, s_tile), lambda n, s: (n, 0, s)),
            ),
            compiler_params=compiler(dimension_semantics=("parallel", "parallel")),
            cost_estimate=cost2,
        )(gate, x_flat)

    return out_flat.reshape(N, C, T, H, W)


def se_gating_reference(x, weight, bias):
    pooled = jnp.mean(x.astype(jnp.float32), axis=(2, 3, 4))                 # (N, C)
    z = pooled @ weight.astype(jnp.float32).T + bias.astype(jnp.float32)
    y = jax.nn.sigmoid(z)[:, :, None, None, None]                            # (N, C, 1, 1, 1)
    return (x.astype(jnp.float32) * y).astype(x.dtype)


if __name__ == "__main__":
    key = jax.random.PRNGKey(0)
    k_x, k_w, k_b, k_x2, k_x3 = jax.random.split(key, 5)

    # Shapes consistent with the module: Conv3d(inplanes, inplanes, k=1) with inplanes=16.
    C = 16
    weight = jax.random.normal(k_w, (C, C), dtype=jnp.float32) * 0.1          # (C_out, C_in)
    bias = jax.random.normal(k_b, (C,), dtype=jnp.float32) * 0.1

    # 1) small batch, aligned S: auto dispatch (N=2 < 4 -> two-pass tiled path).
    x = jax.random.normal(k_x, (2, C, 4, 8, 8), dtype=jnp.float32)            # S = 256
    ref = se_gating_reference(x, weight, bias)
    out = jax.block_until_ready(se_gating(x, weight, bias))
    assert out.shape == x.shape
    assert jnp.allclose(out, ref, atol=1e-5, rtol=1e-5), "auto (two-pass) mismatch"

    # 2) forced fused single-pass path on the same input.
    out_f = jax.block_until_ready(se_gating(x, weight, bias, fused=True))
    assert jnp.allclose(out_f, ref, atol=1e-5, rtol=1e-5), "fused path mismatch"

    # 3) N >= 4: auto dispatch picks the fused path.
    x4 = jax.random.normal(k_x3, (4, C, 4, 8, 8), dtype=jnp.float32)
    ref4 = se_gating_reference(x4, weight, bias)
    out4 = jax.block_until_ready(se_gating(x4, weight, bias))
    assert jnp.allclose(out4, ref4, atol=1e-5, rtol=1e-5), "auto (fused) mismatch"

    # 4) ragged S (T*H*W = 351, not a multiple of 128): exercises the in-kernel lane mask
    #    on the pooling pass (forced small s_tile -> 3 S blocks with a ragged tail) and
    #    the clipped output writes; also the full-extent fused block on ragged S.
    x_odd = jax.random.normal(k_x2, (2, C, 3, 9, 13), dtype=jnp.float32)
    ref_odd = se_gating_reference(x_odd, weight, bias)
    out_tp = jax.block_until_ready(se_gating(x_odd, weight, bias, fused=False, s_tile=128))
    assert jnp.allclose(out_tp, ref_odd, atol=1e-5, rtol=1e-5), "ragged two-pass mismatch"
    out_fu = jax.block_until_ready(se_gating(x_odd, weight, bias, fused=True))
    assert jnp.allclose(out_fu, ref_odd, atol=1e-5, rtol=1e-5), "ragged fused mismatch"

    # 5) bf16 smoke test (gate is applied in native dtype, like PyTorch bf16 execution).
    xb = x.astype(jnp.bfloat16)
    refb = se_gating_reference(xb, weight, bias).astype(jnp.float32)
    outb = jax.block_until_ready(se_gating(xb, weight, bias, fused=True)).astype(jnp.float32)
    assert jnp.allclose(outb, refb, atol=3e-2, rtol=3e-2), "bf16 path mismatch"

    print("KERNEL_OK")
</pallas_src>

<mosaic_0001>
module attributes {stable_mosaic.version = 11 : i64} {
  func.func @_pool_sum_kernel(%arg0: i32, %arg1: i32, %arg2: memref<1x16x256xf32, #tpu.memory_space<vmem>>, %arg3: memref<1x16x1xf32, #tpu.memory_space<vmem>>) attributes {dimension_semantics = [#tpu.dimension_semantics<parallel>, #tpu.dimension_semantics<arbitrary>], iteration_bounds = array<i64: 2, 1>, scalar_prefetch = 0 : i64, scratch_operands = 0 : i64, tpu.core_type = #tpu.core_type<tc>, window_params = [{transform_indices = @transform_0, window_bounds = array<i64: 1, 16, 256>}, {transform_indices = @transform_1, window_bounds = array<i64: 1, 16, 1>}]} {
    %c0_i32 = arith.constant 0 : i32
    %0 = arith.cmpi eq, %arg1, %c0_i32 : i32
    %1 = arith.extui %0 : i1 to i32
    %c0_i32_0 = arith.constant 0 : i32
    %2 = arith.cmpi ne, %1, %c0_i32_0 : i32
    scf.if %2 {
      %cst_9 = arith.constant 0.000000e+00 : f32
      %13 = vector.broadcast %cst_9 : f32 to vector<1x16x1xf32>
      %c0_10 = arith.constant 0 : index
      %c0_11 = arith.constant 0 : index
      %c0_12 = arith.constant 0 : index
      %14 = vector.load %arg3[%c0_10, %c0_11, %c0_12] : memref<1x16x1xf32, #tpu.memory_space<vmem>>, vector<1x16x1xf32>
      tpu.vector_store %arg3[%c0_10, %c0_11, %c0_12], %13 {strides = array<i32>} : memref<1x16x1xf32, #tpu.memory_space<vmem>>, vector<1x16x1xf32>,
    } else {
    }
    %c0 = arith.constant 0 : index
    %c0_1 = arith.constant 0 : index
    %c0_2 = arith.constant 0 : index
    %3 = vector.load %arg2[%c0, %c0_1, %c0_2] : memref<1x16x256xf32, #tpu.memory_space<vmem>>, vector<1x16x256xf32>
    %4 = vector.shape_cast %3 : vector<1x16x256xf32> to vector<16x256xf32>
    %c0_3 = arith.constant 0 : index
    %c0_4 = arith.constant 0 : index
    %c0_5 = arith.constant 0 : index
    %5 = vector.load %arg3[%c0_3, %c0_4, %c0_5] : memref<1x16x1xf32, #tpu.memory_space<vmem>>, vector<1x16x1xf32>
    %6 = vector.shape_cast %5 : vector<1x16x1xf32> to vector<16x1xf32>
    %cst = arith.constant dense<0.000000e+00> : vector<16xf32>
    %7 = vector.multi_reduction <add>, %4, %cst [1] : vector<16x256xf32> to vector<16xf32>
    %8 = vector.shape_cast %7 : vector<16xf32> to vector<16x1xf32>
    %9 = arith.addf %6, %8 : vector<16x1xf32>
    %c0_6 = arith.constant 0 : index
    %c0_7 = arith.constant 0 : index
    %c0_8 = arith.constant 0 : index
    %10 = vector.load %arg3[%c0_6, %c0_7, %c0_8] : memref<1x16x1xf32, #tpu.memory_space<vmem>>, vector<1x16x1xf32>
    %11 = vector.shape_cast %10 : vector<1x16x1xf32> to vector<16x1xf32>
    %12 = vector.shape_cast %9 : vector<16x1xf32> to vector<1x16x1xf32>
    tpu.vector_store %arg3[%c0_6, %c0_7, %c0_8], %12 {strides = array<i32>} : memref<1x16x1xf32, #tpu.memory_space<vmem>>, vector<1x16x1xf32>,
    return
  }
  func.func @transform_0(%arg0: i32, %arg1: i32) -> (i32, i32, i32) {
    %c0_i32 = arith.constant 0 : i32
    %c0_i32_0 = arith.constant 0 : i32
    return %arg0, %c0_i32, %arg1 : i32, i32, i32
  }
  func.func @transform_1(%arg0: i32, %arg1: i32) -> (i32, i32, i32) {
    %c0_i32 = arith.constant 0 : i32
    %c0_i32_0 = arith.constant 0 : i32
    %c0_i32_1 = arith.constant 0 : i32
    return %arg0, %c0_i32, %c0_i32_0 : i32, i32, i32
  }
}

</mosaic_0001>

<llo_original>
// kernel: tpu_custom_call.1
$region0: #{tpu_custom_call.1}
  #allocation0 [shape = 'u32[]', space=smem, size = 0x4, offset = 0x4, fixed_abs, tag = 'smem constant byte address 0x4 - core index']
  #allocation1 [shape = 'u32[144,128]{1,0:T(1,128)}', space=vmem, size = 0x12000, scoped, tag = 'internal scratch']
  %s0 = inlined_call_operand.hbm [shape: f32[2,16,256], index: 0, kind: input, shape index: {}]
  %s1 = inlined_call_operand.vmem [shape: f32[2,16,1], index: 1, kind: output, shape index: {}]
  %s2 = sld [smem:[#allocation0]]
  $region45: #{tpu_custom_call.1} parent=0
    _
  %s4 = ssub.s32 1, %s2
  %s5 = scalar_select 0, %s4, %s2
  $region1: #{tpu_custom_call.1} parent=0
    #allocation2 [shape = 'u8[32768]{0}', space=vmem, size = 0x8000, scoped, tag = 'input window, operand 0']
    #allocation3 [shape = 's32[2]{0}', space=sflag, size = 0x8, scoped, tag = 'scoped memory for tpu_custom_call.1']
    %6 = vsyncpa [#allocation3], 0
    %s7 = scalar_lea.sflag [#allocation3], 1
    %8 = vsyncpa %s7, 0
    loop: start=0, step=1, limit=4
    $region2: #{tpu_custom_call.1} parent=1 // loop_pre_header
      _
    $region3: #{tpu_custom_call.1} parent=1 // loop_header
      %s10 = sphi 0, %s14
      %p11 = scmp.ge.s32.totalorder %s10, 4
      %s17 = sphi 0, %s29
      %s18 = sphi 0, %s25
      %s19 = sphi 0, %s17
      %s20 = sphi 0, %s18
      %s21 = sphi 0, %s19
      %s22 = sphi 0, %s20
      %s34 = sphi 0, %s36
      %s37 = sphi 0, %s34
      %s38 = sphi 0, %s37
      %s54 = sphi 0, %s38
      %s60 = sphi 0, %s62
      %s63 = sphi 0, %s60
      %s64 = sphi 0, %s63
      %s80 = sphi 0, %s64
    $region4: #{tpu_custom_call.1} parent=1 // loop_header_branch
      %13 = sbr.rel (%p11) target = $region8
    $region5: #{tpu_custom_call.1} parent=1 // loop_body
      %s15 = ssub.s32 %s10, 1
      %s16 = ssub.s32 %s10, 2
      %s23 = sadd.s32 1, %s18
      %p24 = scmp.ge.s32.totalorder %s23, 1
      %s25 = scalar_select %p24, 0, %s23
      %s26 = sadd.s32 1, %s17
      %s27 = scalar_select %p24, %s26, %s17
      %p28 = scmp.ge.s32.totalorder %s27, 2
      %s29 = scalar_select %p28, 0, %s27
      %s30 = ssub.s32 %s17, %s29
      %s31 = ssub.s32 %s18, %s25
      %s32 = sor.u32 %s30, %s31
      %p33 = scmp.eq.s32.totalorder %s32, 0
      %s35 = sadd.s32 %s34, 1
      %s36 = scalar_select %p33, %s34, %s35
      %p39 = pneg %p33
      %p40 = scmp.eq.s32.totalorder %s10, 1
      %p41 = por %p39, %p40
      %p42 = scmp.ne.s32.totalorder %s34, %s37
      %p43 = scmp.eq.s32.totalorder %s10, 0
      %p44 = por %p42, %p43
      %p45 = scmp.ne.s32.totalorder %s34, %s37
      %p46 = scmp.eq.s32.totalorder %s15, 1
      %p47 = por %p45, %p46
      %p48 = scmp.ne.s32.totalorder %s37, %s38
      %p49 = scmp.eq.s32.totalorder %s15, 0
      %p50 = por %p48, %p49
      %p51 = scmp.ne.s32.totalorder %s37, %s38
      %p52 = scmp.eq.s32.totalorder %s16, 1
      %p53 = por %p51, %p52
      %p55 = scmp.ne.s32.totalorder %s38, %s54
      %p56 = scmp.eq.s32.totalorder %s16, 0
      %p57 = por %p55, %p56
      %s58 = ssub.s32 %s17, %s29
      %p59 = scmp.eq.s32.totalorder %s58, 0
      %s61 = sadd.s32 %s60, 1
      %s62 = scalar_select %p59, %s60, %s61
      %p65 = pneg %p59
      %p66 = scmp.eq.s32.totalorder %s10, 1
      %p67 = por %p65, %p66
      %p68 = scmp.ne.s32.totalorder %s60, %s63
      %p69 = scmp.eq.s32.totalorder %s10, 0
      %p70 = por %p68, %p69
      %p71 = scmp.ne.s32.totalorder %s60, %s63
      %p72 = scmp.eq.s32.totalorder %s15, 1
      %p73 = por %p71, %p72
      %p74 = scmp.ne.s32.totalorder %s63, %s64
      %p75 = scmp.eq.s32.totalorder %s15, 0
      %p76 = por %p74, %p75
      %p77 = scmp.ne.s32.totalorder %s63, %s64
      %p78 = scmp.eq.s32.totalorder %s16, 1
      %p79 = por %p77, %p78
      %p81 = scmp.ne.s32.totalorder %s64, %s80
      %p82 = scmp.eq.s32.totalorder %s16, 0
      %p83 = por %p81, %p82
      %p84 = scmp.le.s32.totalorder 1, %s10
      %p85 = scmp.lt.s32.totalorder %s10, 3
      %p86 = pnand %p84, %p85
      %p87 = pneg %p86
      // Predicated region
      $region9: #{tpu_custom_call.1} parent=5 // pred_check
        _
      $region10: #{tpu_custom_call.1} parent=5 // pred_check_branch
        %89 = sbr.rel (%p86) target = $region12
      $region11: #{tpu_custom_call.1} parent=5 // pred_region
        %s90 = ssub.s32 %s10, 1
      $region12: #{tpu_custom_call.1} parent=5 // pred_fallthru
        _
      %p91 = scmp.lt.s32.totalorder %s10, 2
      // Predicated region
      $region13: #{tpu_custom_call.1} parent=5 // pred_check
        %p92 = pneg %p91
      $region14: #{tpu_custom_call.1} parent=5 // pred_check_branch
        %94 = sbr.rel (%p92) target = $region16
      $region15: #{tpu_custom_call.1} parent=5 // pred_region
        // Predicated region
        $region17: #{tpu_custom_call.1} parent=15 // pred_check
          %p95 = pneg %p44
        $region18: #{tpu_custom_call.1} parent=15 // pred_check_branch
          %97 = sbr.rel (%p95) target = $region20
        $region19: #{tpu_custom_call.1} parent=15 // pred_region
          %s98 = sand.u32 %s34, 1
          %s99 = scalar_lea.sflag [#allocation3], %s98
          %s100 = sand.u32 %s34, 1
          %s101 = smul.addr %s100, 32
          %s102 = scalar_lea.vmem [#allocation2], %s101
          %s103 = smul.u32 2, %s18
          %s105 = ssub.s32 512, 512
          %106 = vsyncadd %s99, %s105
          %s107 = smul.addr %s17, 4
          %s108 = sadd.s32 %s103, %s107
          %s109 = smul.addr %s108, 128
          %s110 = scalar_lea.hbm %s0, %s109
          %s111 = sshll.u32 %s102, 4
          %s112 = int_to_ptr.vmem [resolvable:$true] %s111
          %117 = dma.hbm_to_vmem [thread:$0]  %s110, 512, %s112, %s99, 256, 256, 16
        $region20: #{tpu_custom_call.1} parent=15 // pred_fallthru
          _
      $region16: #{tpu_custom_call.1} parent=5 // pred_fallthru
        _
      %p118 = scmp.le.s32.totalorder 1, %s10
      %p119 = scmp.lt.s32.totalorder %s10, 3
      %p120 = pnand %p118, %p119
      %p121 = pneg %p120
      // Predicated region
      $region21: #{tpu_custom_call.1} parent=5 // pred_check
        _
      $region22: #{tpu_custom_call.1} parent=5 // pred_check_branch
        %123 = sbr.rel (%p120) target = $region24
      $region23: #{tpu_custom_call.1} parent=5 // pred_region
        %s124 = ssub.s32 %s10, 1
        %s125 = sand.u32 %s37, 1
        %s126 = scalar_lea.sflag [#allocation3], %s125
        %s127 = sand.u32 %s37, 1
        %s128 = smul.addr %s127, 32
        %s129 = scalar_lea.vmem [#allocation2], %s128
        // Predicated region
        $region25: #{tpu_custom_call.1} parent=23 // pred_check
          %p130 = pneg %p50
        $region26: #{tpu_custom_call.1} parent=23 // pred_check_branch
          %132 = sbr.rel (%p130) target = $region28
        $region27: #{tpu_custom_call.1} parent=23 // pred_region
          %133 = dma.done %s126, 512
        $region28: #{tpu_custom_call.1} parent=23 // pred_fallthru
          _
        %s134 = sand.u32 %s37, 1
        %s135 = scalar_lea.sflag [#allocation3], %s134
        %s136 = sand.u32 %s37, 1
        %s137 = smul.addr %s136, 32
        %s138 = scalar_lea.vmem [#allocation2], %s137
        %p139 = pneg %p50
        %p140 = pneg %p47
        %p141 = pneg %p76
        %p142 = pneg %p73
        %p143 = scmp.lt.s32.totalorder %s19, 1
        %s144 = scalar_select %p143, %s19, 1
        %s145 = smul.addr %s144, 2
        %s146 = smul.addr %s145, 8
        %s147 = scalar_lea.vmem %s1, %s146
        %s148 = smul.u32 2, %s20
        %p149 = scmp.lt.s32.totalorder %s19, 1
        %s150 = scalar_select %p149, %s19, 1
        %s151 = smul.addr %s150, 2
        %s152 = smul.addr %s151, 8
        %s153 = scalar_lea.vmem %s1, %s152
        %p154 = scmp.eq.s32.totalorder %s20, 0
        // Predicated region
        $region29: #{tpu_custom_call.1} parent=23 // pred_check
          %p155 = pneg %p154
        $region30: #{tpu_custom_call.1} parent=23 // pred_check_branch
          %157 = sbr.rel (%p155) target = $region32
        $region31: #{tpu_custom_call.1} parent=23 // pred_region
          %vm158 = vcmask 7168
          %159 = vst.msk [vmem:[%s153] sm:$0xff] %vm158, 0.0
          %160 = vst.msk [vmem:[%s153 + $0x8] sm:$0xff] %vm158, 0.0
        $region32: #{tpu_custom_call.1} parent=23 // pred_fallthru
          _
        %v161 = vld [vmem:[%s129] sm:$0xff]
        %v162 = vld [vmem:[%s129 + $0x8] sm:$0xff]
        %v163 = vld [vmem:[%s129 + $0x10] sm:$0xff]
        %v164 = vld [vmem:[%s129 + $0x18] sm:$0xff]
        %v165 = vld [vmem:[%s153] sm:$0xff]
        %v166 = vld [vmem:[%s153 + $0x8] sm:$0xff]
        %v167 = vadd.f32 %v161, %v162
        %168 = vadd.xlane.f32.xlu0 %v167
        %v169 = vpop.xlane.xlu0 %168
        %v170 = vadd.f32 %v163, %v164
        %171 = vadd.xlane.f32.xlu0 %v170
        %v172 = vpop.xlane.xlu0 %171
        %v173 = vadd.f32 %v165, %v169
        %v174 = vadd.f32 %v166, %v172
        %vm175 = vcmask 7168
        %176 = vst.msk [vmem:[%s153] sm:$0xff] %vm175, %v173
        %177 = vst.msk [vmem:[%s153 + $0x8] sm:$0xff] %vm175, %v174
        %p178 = scmp.lt.s32.totalorder %s19, 1
        %s179 = scalar_select %p178, %s19, 1
        %s180 = smul.addr %s179, 2
        %s181 = smul.addr %s180, 8
        %s182 = scalar_lea.vmem %s1, %s181
        // Predicated region
        $region33: #{tpu_custom_call.1} parent=23 // pred_check
          %p183 = pneg %p73
        $region34: #{tpu_custom_call.1} parent=23 // pred_check_branch
          %185 = sbr.rel (%p183) target = $region36
        $region35: #{tpu_custom_call.1} parent=23 // pred_region
          _
        $region36: #{tpu_custom_call.1} parent=23 // pred_fallthru
          _
      $region24: #{tpu_custom_call.1} parent=5 // pred_fallthru
        _
      %p186 = scmp.le.s32.totalorder 2, %s10
      // Predicated region
      $region37: #{tpu_custom_call.1} parent=5 // pred_check
        %p187 = pneg %p186
      $region38: #{tpu_custom_call.1} parent=5 // pred_check_branch
        %189 = sbr.rel (%p187) target = $region40
      $region39: #{tpu_custom_call.1} parent=5 // pred_region
        %s190 = ssub.s32 %s10, 2
        // Predicated region
        $region41: #{tpu_custom_call.1} parent=39 // pred_check
          %p191 = pneg %p79
        $region42: #{tpu_custom_call.1} parent=39 // pred_check_branch
          %193 = sbr.rel (%p191) target = $region44
        $region43: #{tpu_custom_call.1} parent=39 // pred_region
          %p194 = scmp.lt.s32.totalorder %s21, 1
          %s195 = scalar_select %p194, %s21, 1
          %s196 = smul.addr %s195, 2
          %s197 = smul.addr %s196, 8
          %s198 = scalar_lea.vmem %s1, %s197
        $region44: #{tpu_custom_call.1} parent=39 // pred_fallthru
          _
      $region40: #{tpu_custom_call.1} parent=5 // pred_fallthru
        _
    $region6: #{tpu_custom_call.1} parent=1 // loop_footer
      %s14 = sadd.s32 1, %s10
    $region7: #{tpu_custom_call.1} parent=1 // loop_footer_branch
      %9 = sbr.rel target = $region3
    $region8: #{tpu_custom_call.1} parent=1 // loop_exit
      _
    %199 = vsyncpa [#allocation3], 1
    %s200 = scalar_lea.sflag [#allocation3], 1
    %201 = vsyncpa %s200, 1

</llo_original>
